<compile_context>
chip_gen: v5e
topology: v5e:2x2
jax: 0.10.0
libtpu: 0.0.40
codegen_flags: <defaults>
</compile_context>

<pallas_src>
import functools

import jax
import jax.numpy as jnp
from jax.experimental import pallas as pl
from jax.experimental.pallas import tpu as pltpu


def _round_up(v, m):
    return (v + m - 1) // m * m


# --------------------------------------------------------------------------- kernel


def _fused_lstm_kernel(x_ref, h_ref, c_ref, w_ref, b_ref,
                       h_out_ref, c_out_ref, act_ref):
    """One grid step == `layers_per_step` stacked LSTM layers for one batch tile.

    act_ref (VMEM scratch, f32) carries the single MXU LHS operand [Bt, in_max + Hp]:
      cols [0, in_max)        : this layer's input (padded x for layer 0, previous
                                layer's new h for layers > 0; columns past the real
                                input width hit zero-padded weight rows -> harmless)
      cols [in_max, in_max+Hp): this layer's previous hidden state h[l]
    Gate columns of W/b are pre-ordered [i | f | o | g], each padded to Hp (x128).
    """
    lstep = pl.program_id(1)
    lps, bt, hp = h_out_ref.shape
    k = act_ref.shape[1]
    in_max = k - hp

    @pl.when(lstep == 0)
    def _():
        # Load the (zero-padded) external input once per batch tile; stays VMEM-resident.
        act_ref[:, :in_max] = x_ref[...].astype(jnp.float32)

    for j in range(lps):  # static unroll over the layers handled by this grid step
        # Current layer's previous hidden state goes into the trailing Hp columns.
        act_ref[:, in_max:] = h_ref[j]

        # Single fused MXU pass: bf16 [Bt, K] @ bf16 [K, 4Hp], f32 accumulate, + bias.
        gates = (jnp.dot(act_ref[...].astype(jnp.bfloat16), w_ref[j],
                         preferred_element_type=jnp.float32)
                 + b_ref[j])

        # Gate order [i | f | o | g]: sigmoid on the first 3Hp columns only,
        # tanh on the last Hp columns only (lane-aligned static slices).
        sig = jax.nn.sigmoid(gates[:, :3 * hp])
        g_g = jnp.tanh(gates[:, 3 * hp:])
        i_g = sig[:, 0 * hp:1 * hp]
        f_g = sig[:, 1 * hp:2 * hp]
        o_g = sig[:, 2 * hp:3 * hp]

        c_new = f_g * c_ref[j] + i_g * g_g
        h_new = o_g * jnp.tanh(c_new)

        h_out_ref[j] = h_new.astype(h_out_ref.dtype)
        c_out_ref[j] = c_new

        # Feed this layer's output to the next layer's input slot (eval-mode dropout is
        # identity).  Columns [Hp, in_max) keep stale-but-finite x values which hit
        # zero-padded weight rows of layers > 0, so they never contaminate the matmul.
        act_ref[:, :hp] = h_new


# --------------------------------------------------------------------------- wrapper


@functools.partial(jax.jit, static_argnames=("dropout_p", "batch_tiles"))
def multi_layer_lstm_cells(x, hidden, cell, w_stacked, b_stacked,
                           dropout_p=0.0, batch_tiles=1):
    """Forward of MultiLayerLSTMCells (eval mode: dropout_p is ignored).

    x         : [B, input_size]
    hidden    : [L, B, H]
    cell      : [L, B, H]
    w_stacked : [L, in_max+Hp, 4Hp]  (bf16, from pack_params)
    b_stacked : [L, 1, 4Hp]          (f32, gate columns [i|f|o|g], Hp-padded)
    batch_tiles: leading 'parallel' grid axis (use >1 on v7x to engage both TCs).
    returns (h' [L,B,H] in x.dtype, c' [L,B,H] in float32)
    """
    del dropout_p  # eval-mode: F.dropout(..., training=False) is identity

    L, B, H = hidden.shape
    hp4 = w_stacked.shape[2]
    Hp = hp4 // 4
    K = w_stacked.shape[1]
    in_max = K - Hp

    Bp = _round_up(max(B, 1), 8 * batch_tiles)   # sublane-aligned batch, per-tile x8
    Bt = Bp // batch_tiles

    # Host-side zero padding to the lane/sublane-aligned kernel layout.
    x_pad = jnp.zeros((Bp, in_max), x.dtype).at[:B, :x.shape[1]].set(x)
    h_pad = jnp.zeros((L, Bp, Hp), jnp.float32).at[:, :B, :H].set(
        hidden.astype(jnp.float32))
    c_pad = jnp.zeros((L, Bp, Hp), jnp.float32).at[:, :B, :H].set(
        cell.astype(jnp.float32))

    # Shape-conditional grid: fuse all layers into one grid step when the whole stacked
    # W comfortably fits in VMEM; otherwise keep per-layer W prefetch pipelining.
    w_bytes_total = int(w_stacked.size) * w_stacked.dtype.itemsize
    layers_per_step = L if w_bytes_total <= (4 << 20) else 1
    lsteps = L // layers_per_step

    out_h_dtype = x.dtype
    itm_x = jnp.dtype(x.dtype).itemsize
    itm_h = jnp.dtype(out_h_dtype).itemsize
    itm_w = w_stacked.dtype.itemsize

    # Advisory cost estimate (dtype-aware).
    flops = 2 * L * Bp * K * hp4
    transcendentals = L * Bp * (3 * Hp + Hp + Hp)   # sigmoid(3Hp) + tanh(g) + tanh(c)
    bytes_accessed = int(
        batch_tiles * (w_bytes_total
                       + b_stacked.size * b_stacked.dtype.itemsize)
        + x_pad.size * itm_x
        + (h_pad.size + c_pad.size) * 4
        + L * Bp * Hp * (itm_h + 4))

    # Explicit VMEM budget: double-buffered blocks + scratch + intermediates headroom.
    blk_bytes = (Bt * in_max * itm_x
                 + 2 * layers_per_step * Bt * Hp * 4          # h, c inputs (f32)
                 + layers_per_step * K * hp4 * itm_w          # W (bf16)
                 + layers_per_step * hp4 * 4                  # bias
                 + layers_per_step * Bt * Hp * (itm_h + 4))   # outputs
    scratch_bytes = Bt * K * 4
    inter_bytes = 3 * Bt * hp4 * 4                            # gates / sig / tanh temps
    vmem_limit = int(min(64 << 20,
                         max(2 * blk_bytes + scratch_bytes + inter_bytes + (4 << 20),
                             16 << 20)))

    grid_spec = pltpu.PrefetchScalarGridSpec(
        num_scalar_prefetch=0,
        grid=(batch_tiles, lsteps),
        in_specs=[
            pl.BlockSpec((Bt, in_max), lambda bt, l: (bt, 0)),                 # x
            pl.BlockSpec((layers_per_step, Bt, Hp), lambda bt, l: (l, bt, 0)),  # h
            pl.BlockSpec((layers_per_step, Bt, Hp), lambda bt, l: (l, bt, 0)),  # c
            pl.BlockSpec((layers_per_step, K, hp4), lambda bt, l: (l, 0, 0)),   # W
            pl.BlockSpec((layers_per_step, 1, hp4), lambda bt, l: (l, 0, 0)),   # b
        ],
        out_specs=(
            pl.BlockSpec((layers_per_step, Bt, Hp), lambda bt, l: (l, bt, 0)),  # h'
            pl.BlockSpec((layers_per_step, Bt, Hp), lambda bt, l: (l, bt, 0)),  # c'
        ),
        scratch_shapes=[pltpu.VMEM((Bt, K), jnp.float32)],   # carried activation
    )

    h_full, c_full = pl.pallas_call(
        _fused_lstm_kernel,
        out_shape=(
            jax.ShapeDtypeStruct((L, Bp, Hp), out_h_dtype),
            jax.ShapeDtypeStruct((L, Bp, Hp), jnp.float32),
        ),
        grid_spec=grid_spec,
        compiler_params=pltpu.CompilerParams(
            dimension_semantics=("parallel", "arbitrary"),  # batch tiles ||, layers seq
            vmem_limit_bytes=vmem_limit,
        ),
        cost_estimate=pl.CostEstimate(
            flops=flops,
            transcendentals=transcendentals,
            bytes_accessed=bytes_accessed,
        ),
    )(x_pad, h_pad, c_pad, w_stacked, b_stacked)

    return h_full[:, :B, :H], c_full[:, :B, :H]


# ------------------------------------------------------------------------ packing


def _reorder_pad_gates(w, H, Hp):
    """[rows, 4H] cols [i|f|g|o] -> [rows, 4Hp] cols [i|f|o|g], each gate Hp-padded."""
    i = w[:, 0 * H:1 * H]
    f = w[:, 1 * H:2 * H]
    g = w[:, 2 * H:3 * H]
    o = w[:, 3 * H:4 * H]
    out = jnp.zeros((w.shape[0], 4 * Hp), w.dtype)
    out = out.at[:, 0 * Hp:0 * Hp + H].set(i)
    out = out.at[:, 1 * Hp:1 * Hp + H].set(f)
    out = out.at[:, 2 * Hp:2 * Hp + H].set(o)
    out = out.at[:, 3 * Hp:3 * Hp + H].set(g)
    return out


def pack_params(params, input_size, hidden_size, weight_dtype=jnp.bfloat16):
    """Stack per-layer (w_ih [in_l,4H], w_hh [H,4H], b [1,4H]) into fused arrays.

    Returns:
      w_stacked [L, in_max+Hp, 4Hp] in weight_dtype (bf16 by default),
      b_stacked [L, 1, 4Hp] in float32.
    Layout: rows [0,in_l)=W_ih, [in_l,in_max)=0, [in_max,in_max+H)=W_hh, rest 0.
    Gate columns are reordered to [i|f|o|g] and each gate block padded to Hp (x128).
    """
    # TODO(synk): when input_size >> H a split-K (l==0 only) scheme would avoid
    #             streaming zero-padded rows for layers > 0; not needed when in~H.
    H = hidden_size
    Hp = _round_up(H, 128)
    in_max = max(_round_up(input_size, 128), Hp)
    K = in_max + Hp
    ws, bs = [], []
    for (w_ih, w_hh, b) in params:
        in_l = w_ih.shape[0]
        w = jnp.zeros((K, 4 * Hp), jnp.float32)
        w = w.at[:in_l, :].set(_reorder_pad_gates(w_ih, H, Hp))
        w = w.at[in_max:in_max + H, :].set(_reorder_pad_gates(w_hh, H, Hp))
        # Load-bearing invariant: padded rows must be zero so stale/padded act columns
        # cannot contaminate layers' gate pre-activations.
        assert bool(jnp.all(w[in_l:in_max, :] == 0))
        assert bool(jnp.all(w[in_max + H:, :] == 0))
        ws.append(w.astype(weight_dtype))
        bs.append(_reorder_pad_gates(b, H, Hp).astype(jnp.float32))
    w_stacked = jnp.stack(ws, axis=0)
    b_stacked = jnp.stack(bs, axis=0).reshape(len(params), 1, 4 * Hp)
    return w_stacked, b_stacked


# --------------------------------------------------------------------- references


def _reference_f32(x, hidden, cell, params):
    """Pure-JAX f32 reference matching PyTorch nn.LSTMCell semantics."""
    out_h, out_c = [], []
    inp = x
    H = hidden.shape[-1]
    for layer, (w_ih, w_hh, b) in enumerate(params):
        gates = inp @ w_ih + hidden[layer] @ w_hh + b
        i = jax.nn.sigmoid(gates[:, 0 * H:1 * H])
        f = jax.nn.sigmoid(gates[:, 1 * H:2 * H])
        g = jnp.tanh(gates[:, 2 * H:3 * H])
        o = jax.nn.sigmoid(gates[:, 3 * H:4 * H])
        c_new = f * cell[layer] + i * g
        h_new = o * jnp.tanh(c_new)
        out_h.append(h_new)
        out_c.append(c_new)
        inp = h_new
    return jnp.stack(out_h, 0), jnp.stack(out_c, 0)


def _reference_bf16_mirror(x, hidden, cell, params):
    """Reference mirroring the kernel's numerics (bf16 matmul operands, f32 accum/carry)."""
    def r(a):
        return a.astype(jnp.bfloat16).astype(jnp.float32)

    out_h, out_c = [], []
    inp = x.astype(jnp.float32)
    H = hidden.shape[-1]
    for layer, (w_ih, w_hh, b) in enumerate(params):
        gates = (r(inp) @ r(w_ih)
                 + r(hidden[layer].astype(jnp.float32)) @ r(w_hh) + b)
        i = jax.nn.sigmoid(gates[:, 0 * H:1 * H])
        f = jax.nn.sigmoid(gates[:, 1 * H:2 * H])
        g = jnp.tanh(gates[:, 2 * H:3 * H])
        o = jax.nn.sigmoid(gates[:, 3 * H:4 * H])
        c_new = f * cell[layer].astype(jnp.float32) + i * g
        h_new = o * jnp.tanh(c_new)
        out_h.append(h_new)
        out_c.append(c_new)
        inp = h_new
    return jnp.stack(out_h, 0), jnp.stack(out_c, 0)


def init_params(key, input_size, hidden_size, num_layers):
    """Deterministic init mirroring nn.LSTMCell: U(-1/sqrt(H), 1/sqrt(H))."""
    bound = 1.0 / (hidden_size ** 0.5)
    params = []
    in_sz = input_size
    for _ in range(num_layers):
        key, k1, k2, k3, k4 = jax.random.split(key, 5)
        # PyTorch stores weight_ih [4H, in]; we keep the transpose [in, 4H].
        w_ih = jax.random.uniform(k1, (in_sz, 4 * hidden_size),
                                  minval=-bound, maxval=bound, dtype=jnp.float32)
        w_hh = jax.random.uniform(k2, (hidden_size, 4 * hidden_size),
                                  minval=-bound, maxval=bound, dtype=jnp.float32)
        b_ih = jax.random.uniform(k3, (1, 4 * hidden_size),
                                  minval=-bound, maxval=bound, dtype=jnp.float32)
        b_hh = jax.random.uniform(k4, (1, 4 * hidden_size),
                                  minval=-bound, maxval=bound, dtype=jnp.float32)
        params.append((w_ih, w_hh, b_ih + b_hh))
        in_sz = hidden_size
    return params


if __name__ == "__main__":
    B = 2            # batch
    INPUT_SIZE = 48  # input feature size (layer 0)
    HIDDEN = 32      # hidden size
    LAYERS = 2
    DROPOUT = 0.1    # identity in eval mode

    key = jax.random.PRNGKey(0)
    kx, kh, kc, kp = jax.random.split(key, 4)

    x = jax.random.normal(kx, (B, INPUT_SIZE), dtype=jnp.float32)
    hidden0 = jax.random.normal(kh, (LAYERS, B, HIDDEN), dtype=jnp.float32)
    cell0 = jax.random.normal(kc, (LAYERS, B, HIDDEN), dtype=jnp.float32)
    params = init_params(kp, INPUT_SIZE, HIDDEN, LAYERS)
    w_stacked, b_stacked = pack_params(params, INPUT_SIZE, HIDDEN)

    out_h, out_c = multi_layer_lstm_cells(x, hidden0, cell0, w_stacked, b_stacked,
                                          dropout_p=DROPOUT, batch_tiles=1)
    out_h = jax.block_until_ready(out_h)
    out_c = jax.block_until_ready(out_c)

    assert out_h.shape == (LAYERS, B, HIDDEN) and out_c.shape == (LAYERS, B, HIDDEN)

    # Tight check against a reference that mirrors the kernel's bf16-operand numerics.
    mir_h, mir_c = _reference_bf16_mirror(x, hidden0, cell0, params)
    assert jnp.allclose(out_h, mir_h, atol=1e-3, rtol=1e-3)
    assert jnp.allclose(out_c, mir_c, atol=1e-3, rtol=1e-3)

    # Loose sanity check against the pure f32 PyTorch-semantics reference
    # (difference is only the intentional bf16 rounding of matmul operands).
    ref_h, ref_c = _reference_f32(x, hidden0, cell0, params)
    assert jnp.allclose(out_h, ref_h, atol=1e-1, rtol=1e-1)
    assert jnp.allclose(out_c, ref_c, atol=1e-1, rtol=1e-1)

    print("KERNEL_OK")
</pallas_src>

<mosaic_0001>
module attributes {stable_mosaic.version = 11 : i64} {
  func.func @_fused_lstm_kernel(%arg0: i32, %arg1: i32, %arg2: memref<8x128xf32, #tpu.memory_space<vmem>>, %arg3: memref<2x8x128xf32, #tpu.memory_space<vmem>>, %arg4: memref<2x8x128xf32, #tpu.memory_space<vmem>>, %arg5: memref<2x256x512xbf16, #tpu.memory_space<vmem>>, %arg6: memref<2x1x512xf32, #tpu.memory_space<vmem>>, %arg7: memref<2x8x128xf32, #tpu.memory_space<vmem>>, %arg8: memref<2x8x128xf32, #tpu.memory_space<vmem>>, %arg9: memref<8x256xf32, #tpu.memory_space<vmem>>) attributes {dimension_semantics = [#tpu.dimension_semantics<parallel>, #tpu.dimension_semantics<arbitrary>], iteration_bounds = array<i64: 1, 1>, scalar_prefetch = 0 : i64, scratch_operands = 1 : i64, tpu.core_type = #tpu.core_type<tc>, window_params = [{transform_indices = @transform_0, window_bounds = array<i64: 8, 128>}, {transform_indices = @transform_1, window_bounds = array<i64: 2, 8, 128>}, {transform_indices = @transform_2, window_bounds = array<i64: 2, 8, 128>}, {transform_indices = @transform_3, window_bounds = array<i64: 2, 256, 512>}, {transform_indices = @transform_4, window_bounds = array<i64: 2, 1, 512>}, {transform_indices = @transform_5, window_bounds = array<i64: 2, 8, 128>}, {transform_indices = @transform_6, window_bounds = array<i64: 2, 8, 128>}]} {
    %c0_i32 = arith.constant 0 : i32
    %0 = arith.cmpi eq, %arg1, %c0_i32 : i32
    %1 = arith.extui %0 : i1 to i32
    %c0_i32_0 = arith.constant 0 : i32
    %2 = arith.cmpi ne, %1, %c0_i32_0 : i32
    scf.if %2 {
      %c0_49 = arith.constant 0 : index
      %c0_50 = arith.constant 0 : index
      %77 = vector.load %arg2[%c0_49, %c0_50] : memref<8x128xf32, #tpu.memory_space<vmem>>, vector<8x128xf32>
      %c0_51 = arith.constant 0 : index
      %c0_52 = arith.constant 0 : index
      %78 = vector.load %arg9[%c0_51, %c0_52] : memref<8x256xf32, #tpu.memory_space<vmem>>, vector<8x128xf32>
      tpu.vector_store %arg9[%c0_51, %c0_52], %77 {strides = array<i32>} : memref<8x256xf32, #tpu.memory_space<vmem>>, vector<8x128xf32>,
    } else {
    }
    %c0 = arith.constant 0 : index
    %c0_1 = arith.constant 0 : index
    %c0_2 = arith.constant 0 : index
    %3 = vector.load %arg3[%c0, %c0_1, %c0_2] : memref<2x8x128xf32, #tpu.memory_space<vmem>>, vector<1x8x128xf32>
    %4 = vector.shape_cast %3 : vector<1x8x128xf32> to vector<8x128xf32>
    %c0_3 = arith.constant 0 : index
    %c128 = arith.constant 128 : index
    %5 = vector.load %arg9[%c0_3, %c128] : memref<8x256xf32, #tpu.memory_space<vmem>>, vector<8x128xf32>
    tpu.vector_store %arg9[%c0_3, %c128], %4 {strides = array<i32>} : memref<8x256xf32, #tpu.memory_space<vmem>>, vector<8x128xf32>,
    %c0_4 = arith.constant 0 : index
    %c0_5 = arith.constant 0 : index
    %6 = vector.load %arg9[%c0_4, %c0_5] : memref<8x256xf32, #tpu.memory_space<vmem>>, vector<8x256xf32>
    %7 = arith.truncf %6 : vector<8x256xf32> to vector<8x256xbf16>
    %c0_6 = arith.constant 0 : index
    %c0_7 = arith.constant 0 : index
    %c0_8 = arith.constant 0 : index
    %8 = vector.load %arg5[%c0_6, %c0_7, %c0_8] : memref<2x256x512xbf16, #tpu.memory_space<vmem>>, vector<1x256x512xbf16>
    %9 = vector.shape_cast %8 : vector<1x256x512xbf16> to vector<256x512xbf16>
    %cst = arith.constant dense<0.000000e+00> : vector<8x512xf32>
    %10 = tpu.matmul %7, %9, %cst {dimension_numbers = #tpu.dot_dimension_numbers<[1], [0], [0], [1], [0, 0, 1, 1], [], []>} : vector<8x256xbf16>, vector<256x512xbf16>, vector<8x512xf32> -> vector<8x512xf32>
    %c0_9 = arith.constant 0 : index
    %c0_10 = arith.constant 0 : index
    %c0_11 = arith.constant 0 : index
    %11 = vector.load %arg6[%c0_9, %c0_10, %c0_11] : memref<2x1x512xf32, #tpu.memory_space<vmem>>, vector<1x1x512xf32>
    %12 = vector.shape_cast %11 : vector<1x1x512xf32> to vector<1x512xf32>
    %13 = vector.broadcast %12 : vector<1x512xf32> to vector<8x512xf32>
    %14 = arith.addf %10, %13 : vector<8x512xf32>
    %15 = vector.extract_strided_slice %14 {offsets = [0, 0], sizes = [8, 384], strides = [1, 1]} : vector<8x512xf32> to vector<8x384xf32>
    %16 = arith.negf %15 : vector<8x384xf32>
    %17 = math.exp %16 : vector<8x384xf32>
    %cst_12 = arith.constant 1.000000e+00 : f32
    %18 = vector.broadcast %cst_12 : f32 to vector<8x384xf32>
    %19 = arith.addf %18, %17 : vector<8x384xf32>
    %20 = arith.divf %18, %19 : vector<8x384xf32>
    %21 = vector.extract_strided_slice %14 {offsets = [0, 384], sizes = [8, 128], strides = [1, 1]} : vector<8x512xf32> to vector<8x128xf32>
    %22 = math.tanh %21 : vector<8x128xf32>
    %23 = vector.extract_strided_slice %20 {offsets = [0, 0], sizes = [8, 128], strides = [1, 1]} : vector<8x384xf32> to vector<8x128xf32>
    %24 = vector.extract_strided_slice %20 {offsets = [0, 128], sizes = [8, 128], strides = [1, 1]} : vector<8x384xf32> to vector<8x128xf32>
    %25 = vector.extract_strided_slice %20 {offsets = [0, 256], sizes = [8, 128], strides = [1, 1]} : vector<8x384xf32> to vector<8x128xf32>
    %c0_13 = arith.constant 0 : index
    %c0_14 = arith.constant 0 : index
    %c0_15 = arith.constant 0 : index
    %26 = vector.load %arg4[%c0_13, %c0_14, %c0_15] : memref<2x8x128xf32, #tpu.memory_space<vmem>>, vector<1x8x128xf32>
    %27 = vector.shape_cast %26 : vector<1x8x128xf32> to vector<8x128xf32>
    %28 = arith.mulf %24, %27 : vector<8x128xf32>
    %29 = arith.mulf %23, %22 : vector<8x128xf32>
    %30 = arith.addf %28, %29 : vector<8x128xf32>
    %31 = math.tanh %30 : vector<8x128xf32>
    %32 = arith.mulf %25, %31 : vector<8x128xf32>
    %c0_16 = arith.constant 0 : index
    %c0_17 = arith.constant 0 : index
    %c0_18 = arith.constant 0 : index
    %33 = vector.load %arg7[%c0_16, %c0_17, %c0_18] : memref<2x8x128xf32, #tpu.memory_space<vmem>>, vector<1x8x128xf32>
    %34 = vector.shape_cast %33 : vector<1x8x128xf32> to vector<8x128xf32>
    %35 = vector.shape_cast %32 : vector<8x128xf32> to vector<1x8x128xf32>
    tpu.vector_store %arg7[%c0_16, %c0_17, %c0_18], %35 {strides = array<i32>} : memref<2x8x128xf32, #tpu.memory_space<vmem>>, vector<1x8x128xf32>,
    %c0_19 = arith.constant 0 : index
    %c0_20 = arith.constant 0 : index
    %c0_21 = arith.constant 0 : index
    %36 = vector.load %arg8[%c0_19, %c0_20, %c0_21] : memref<2x8x128xf32, #tpu.memory_space<vmem>>, vector<1x8x128xf32>
    %37 = vector.shape_cast %36 : vector<1x8x128xf32> to vector<8x128xf32>
    %38 = vector.shape_cast %30 : vector<8x128xf32> to vector<1x8x128xf32>
    tpu.vector_store %arg8[%c0_19, %c0_20, %c0_21], %38 {strides = array<i32>} : memref<2x8x128xf32, #tpu.memory_space<vmem>>, vector<1x8x128xf32>,
    %c0_22 = arith.constant 0 : index
    %c0_23 = arith.constant 0 : index
    %39 = vector.load %arg9[%c0_22, %c0_23] : memref<8x256xf32, #tpu.memory_space<vmem>>, vector<8x128xf32>
    tpu.vector_store %arg9[%c0_22, %c0_23], %32 {strides = array<i32>} : memref<8x256xf32, #tpu.memory_space<vmem>>, vector<8x128xf32>,
    %c1 = arith.constant 1 : index
    %c0_24 = arith.constant 0 : index
    %c0_25 = arith.constant 0 : index
    %40 = vector.load %arg3[%c1, %c0_24, %c0_25] : memref<2x8x128xf32, #tpu.memory_space<vmem>>, vector<1x8x128xf32>
    %41 = vector.shape_cast %40 : vector<1x8x128xf32> to vector<8x128xf32>
    %c0_26 = arith.constant 0 : index
    %c128_27 = arith.constant 128 : index
    %42 = vector.load %arg9[%c0_26, %c128_27] : memref<8x256xf32, #tpu.memory_space<vmem>>, vector<8x128xf32>
    tpu.vector_store %arg9[%c0_26, %c128_27], %41 {strides = array<i32>} : memref<8x256xf32, #tpu.memory_space<vmem>>, vector<8x128xf32>,
    %c0_28 = arith.constant 0 : index
    %c0_29 = arith.constant 0 : index
    %43 = vector.load %arg9[%c0_28, %c0_29] : memref<8x256xf32, #tpu.memory_space<vmem>>, vector<8x256xf32>
    %44 = arith.truncf %43 : vector<8x256xf32> to vector<8x256xbf16>
    %c1_30 = arith.constant 1 : index
    %c0_31 = arith.constant 0 : index
    %c0_32 = arith.constant 0 : index
    %45 = vector.load %arg5[%c1_30, %c0_31, %c0_32] : memref<2x256x512xbf16, #tpu.memory_space<vmem>>, vector<1x256x512xbf16>
    %46 = vector.shape_cast %45 : vector<1x256x512xbf16> to vector<256x512xbf16>
    %cst_33 = arith.constant dense<0.000000e+00> : vector<8x512xf32>
    %47 = tpu.matmul %44, %46, %cst_33 {dimension_numbers = #tpu.dot_dimension_numbers<[1], [0], [0], [1], [0, 0, 1, 1], [], []>} : vector<8x256xbf16>, vector<256x512xbf16>, vector<8x512xf32> -> vector<8x512xf32>
    %c1_34 = arith.constant 1 : index
    %c0_35 = arith.constant 0 : index
    %c0_36 = arith.constant 0 : index
    %48 = vector.load %arg6[%c1_34, %c0_35, %c0_36] : memref<2x1x512xf32, #tpu.memory_space<vmem>>, vector<1x1x512xf32>
    %49 = vector.shape_cast %48 : vector<1x1x512xf32> to vector<1x512xf32>
    %50 = vector.broadcast %49 : vector<1x512xf32> to vector<8x512xf32>
    %51 = arith.addf %47, %50 : vector<8x512xf32>
    %52 = vector.extract_strided_slice %51 {offsets = [0, 0], sizes = [8, 384], strides = [1, 1]} : vector<8x512xf32> to vector<8x384xf32>
    %53 = arith.negf %52 : vector<8x384xf32>
    %54 = math.exp %53 : vector<8x384xf32>
    %cst_37 = arith.constant 1.000000e+00 : f32
    %55 = vector.broadcast %cst_37 : f32 to vector<8x384xf32>
    %56 = arith.addf %55, %54 : vector<8x384xf32>
    %57 = arith.divf %55, %56 : vector<8x384xf32>
    %58 = vector.extract_strided_slice %51 {offsets = [0, 384], sizes = [8, 128], strides = [1, 1]} : vector<8x512xf32> to vector<8x128xf32>
    %59 = math.tanh %58 : vector<8x128xf32>
    %60 = vector.extract_strided_slice %57 {offsets = [0, 0], sizes = [8, 128], strides = [1, 1]} : vector<8x384xf32> to vector<8x128xf32>
    %61 = vector.extract_strided_slice %57 {offsets = [0, 128], sizes = [8, 128], strides = [1, 1]} : vector<8x384xf32> to vector<8x128xf32>
    %62 = vector.extract_strided_slice %57 {offsets = [0, 256], sizes = [8, 128], strides = [1, 1]} : vector<8x384xf32> to vector<8x128xf32>
    %c1_38 = arith.constant 1 : index
    %c0_39 = arith.constant 0 : index
    %c0_40 = arith.constant 0 : index
    %63 = vector.load %arg4[%c1_38, %c0_39, %c0_40] : memref<2x8x128xf32, #tpu.memory_space<vmem>>, vector<1x8x128xf32>
    %64 = vector.shape_cast %63 : vector<1x8x128xf32> to vector<8x128xf32>
    %65 = arith.mulf %61, %64 : vector<8x128xf32>
    %66 = arith.mulf %60, %59 : vector<8x128xf32>
    %67 = arith.addf %65, %66 : vector<8x128xf32>
    %68 = math.tanh %67 : vector<8x128xf32>
    %69 = arith.mulf %62, %68 : vector<8x128xf32>
    %c1_41 = arith.constant 1 : index
    %c0_42 = arith.constant 0 : index
    %c0_43 = arith.constant 0 : index
    %70 = vector.load %arg7[%c1_41, %c0_42, %c0_43] : memref<2x8x128xf32, #tpu.memory_space<vmem>>, vector<1x8x128xf32>
    %71 = vector.shape_cast %70 : vector<1x8x128xf32> to vector<8x128xf32>
    %72 = vector.shape_cast %69 : vector<8x128xf32> to vector<1x8x128xf32>
    tpu.vector_store %arg7[%c1_41, %c0_42, %c0_43], %72 {strides = array<i32>} : memref<2x8x128xf32, #tpu.memory_space<vmem>>, vector<1x8x128xf32>,
    %c1_44 = arith.constant 1 : index
    %c0_45 = arith.constant 0 : index
    %c0_46 = arith.constant 0 : index
    %73 = vector.load %arg8[%c1_44, %c0_45, %c0_46] : memref<2x8x128xf32, #tpu.memory_space<vmem>>, vector<1x8x128xf32>
    %74 = vector.shape_cast %73 : vector<1x8x128xf32> to vector<8x128xf32>
    %75 = vector.shape_cast %67 : vector<8x128xf32> to vector<1x8x128xf32>
    tpu.vector_store %arg8[%c1_44, %c0_45, %c0_46], %75 {strides = array<i32>} : memref<2x8x128xf32, #tpu.memory_space<vmem>>, vector<1x8x128xf32>,
    %c0_47 = arith.constant 0 : index
    %c0_48 = arith.constant 0 : index
    %76 = vector.load %arg9[%c0_47, %c0_48] : memref<8x256xf32, #tpu.memory_space<vmem>>, vector<8x128xf32>
    tpu.vector_store %arg9[%c0_47, %c0_48], %69 {strides = array<i32>} : memref<8x256xf32, #tpu.memory_space<vmem>>, vector<8x128xf32>,
    return
  }
  func.func @transform_0(%arg0: i32, %arg1: i32) -> (i32, i32) {
    %c0_i32 = arith.constant 0 : i32
    %c0_i32_0 = arith.constant 0 : i32
    return %arg0, %c0_i32 : i32, i32
  }
  func.func @transform_1(%arg0: i32, %arg1: i32) -> (i32, i32, i32) {
    %c0_i32 = arith.constant 0 : i32
    %c0_i32_0 = arith.constant 0 : i32
    return %arg1, %arg0, %c0_i32 : i32, i32, i32
  }
  func.func @transform_2(%arg0: i32, %arg1: i32) -> (i32, i32, i32) {
    %c0_i32 = arith.constant 0 : i32
    %c0_i32_0 = arith.constant 0 : i32
    return %arg1, %arg0, %c0_i32 : i32, i32, i32
  }
  func.func @transform_3(%arg0: i32, %arg1: i32) -> (i32, i32, i32) {
    %c0_i32 = arith.constant 0 : i32
    %c0_i32_0 = arith.constant 0 : i32
    %c0_i32_1 = arith.constant 0 : i32
    return %arg1, %c0_i32, %c0_i32_0 : i32, i32, i32
  }
  func.func @transform_4(%arg0: i32, %arg1: i32) -> (i32, i32, i32) {
    %c0_i32 = arith.constant 0 : i32
    %c0_i32_0 = arith.constant 0 : i32
    %c0_i32_1 = arith.constant 0 : i32
    return %arg1, %c0_i32, %c0_i32_0 : i32, i32, i32
  }
  func.func @transform_5(%arg0: i32, %arg1: i32) -> (i32, i32, i32) {
    %c0_i32 = arith.constant 0 : i32
    %c0_i32_0 = arith.constant 0 : i32
    return %arg1, %arg0, %c0_i32 : i32, i32, i32
  }
  func.func @transform_6(%arg0: i32, %arg1: i32) -> (i32, i32, i32) {
    %c0_i32 = arith.constant 0 : i32
    %c0_i32_0 = arith.constant 0 : i32
    return %arg1, %arg0, %c0_i32 : i32, i32, i32
  }
}

</mosaic_0001>

<llo_original>
// kernel: multi_layer_lstm_cells.1
$region0: #{multi_layer_lstm_cells.1}
  #allocation0 [shape = 'u32[]', space=smem, size = 0x4, offset = 0x4, fixed_abs, tag = 'smem constant byte address 0x4 - core index']
  #allocation1 [shape = 'u32[72,128]{1,0:T(1,128)}', space=vmem, size = 0x9000, scoped, tag = 'internal scratch']
  #allocation2 [shape = 'f32[8,256]{1,0:T(8,128)}', space=vmem, size = 0x2000, scoped, tag = 'scratch operand']
  %s0 = inlined_call_operand.vmem [shape: f32[8,128], index: 0, kind: input, shape index: {}]
  %s1 = inlined_call_operand.vmem [shape: f32[2,8,128], index: 1, kind: input, shape index: {}]
  %s2 = inlined_call_operand.vmem [shape: f32[2,8,128], index: 2, kind: input, shape index: {}]
  %s3 = inlined_call_operand.hbm [shape: bf16[2,256,512], index: 3, kind: input, shape index: {}]
  %s4 = inlined_call_operand.vmem [shape: f32[2,1,512], index: 4, kind: input, shape index: {}]
  %s5 = inlined_call_operand.vmem [shape: f32[2,8,128], index: 5, kind: output, shape index: {0}]
  %s6 = inlined_call_operand.vmem [shape: f32[2,8,128], index: 6, kind: output, shape index: {1}]
  %7 = xla_tuple %s5, %s6
  %s8 = sld [smem:[#allocation0]]
  $region46: #{multi_layer_lstm_cells.1} parent=0
    _
  %s10 = ssub.s32 1, %s8
  %s11 = scalar_select 0, %s10, %s8
  $region1: #{multi_layer_lstm_cells.1} parent=0
    #allocation3 [shape = 'u8[524288]{0}', space=vmem, size = 0x80000, scoped, tag = 'input window, operand 3, single buffered']
    #allocation4 [shape = 's32[1]{0}', space=sflag, size = 0x4, scoped, tag = 'scoped memory for multi_layer_lstm_cells.1']
    %12 = vsyncpa [#allocation4], 0
    // Predicated region
    $region2: #{multi_layer_lstm_cells.1} parent=1 // pred_check
      _
    $region3: #{multi_layer_lstm_cells.1} parent=1 // pred_check_branch
      %14 = sbr.rel (0) target = $region5
    $region4: #{multi_layer_lstm_cells.1} parent=1 // pred_region
      _
    $region5: #{multi_layer_lstm_cells.1} parent=1 // pred_fallthru
      _
    // Predicated region
    $region6: #{multi_layer_lstm_cells.1} parent=1 // pred_check
      _
    $region7: #{multi_layer_lstm_cells.1} parent=1 // pred_check_branch
      %16 = sbr.rel (0) target = $region9
    $region8: #{multi_layer_lstm_cells.1} parent=1 // pred_region
      _
    $region9: #{multi_layer_lstm_cells.1} parent=1 // pred_fallthru
      _
    // Predicated region
    $region10: #{multi_layer_lstm_cells.1} parent=1 // pred_check
      _
    $region11: #{multi_layer_lstm_cells.1} parent=1 // pred_check_branch
      %18 = sbr.rel (0) target = $region13
    $region12: #{multi_layer_lstm_cells.1} parent=1 // pred_region
      _
    $region13: #{multi_layer_lstm_cells.1} parent=1 // pred_fallthru
      _
    // Predicated region
    $region14: #{multi_layer_lstm_cells.1} parent=1 // pred_check
      _
    $region15: #{multi_layer_lstm_cells.1} parent=1 // pred_check_branch
      %20 = sbr.rel (0) target = $region17
    $region16: #{multi_layer_lstm_cells.1} parent=1 // pred_region
      %22 = vsyncadd [#allocation4], 0
      %s23 = sshll.u32 %s3, 4
      %s24 = int_to_ptr.hbm [resolvable:$true] %s23
      %s25 = sshll.u32 [#allocation3], 4
      %s26 = int_to_ptr.vmem [resolvable:$true] %s25
      %31 = dma.hbm_to_vmem [thread:$0]  %s24, 16384, %s26, [#allocation4], 256, 256, 16
    $region17: #{multi_layer_lstm_cells.1} parent=1 // pred_fallthru
      _
    // Predicated region
    $region18: #{multi_layer_lstm_cells.1} parent=1 // pred_check
      _
    $region19: #{multi_layer_lstm_cells.1} parent=1 // pred_check_branch
      %33 = sbr.rel (0) target = $region21
    $region20: #{multi_layer_lstm_cells.1} parent=1 // pred_region
      _
    $region21: #{multi_layer_lstm_cells.1} parent=1 // pred_fallthru
      _
    // Predicated region
    $region22: #{multi_layer_lstm_cells.1} parent=1 // pred_check
      _
    $region23: #{multi_layer_lstm_cells.1} parent=1 // pred_check_branch
      %35 = sbr.rel (0) target = $region25
    $region24: #{multi_layer_lstm_cells.1} parent=1 // pred_region
      %37 = dma.done [#allocation4], 16384
    $region25: #{multi_layer_lstm_cells.1} parent=1 // pred_fallthru
      _
    %p38 = scmp.eq.s32.totalorder 0, 0
    // Predicated region
    $region26: #{multi_layer_lstm_cells.1} parent=1 // pred_check
      %p39 = pneg %p38
    $region27: #{multi_layer_lstm_cells.1} parent=1 // pred_check_branch
      %41 = sbr.rel (%p39) target = $region29
    $region28: #{multi_layer_lstm_cells.1} parent=1 // pred_region
      %v42 = vld [vmem:[%s0] sm:$0xff]
      %43 = vst [vmem:[#allocation2] sm:$0xff] %v42
    $region29: #{multi_layer_lstm_cells.1} parent=1 // pred_fallthru
      _
    %v44 = vld [vmem:[%s1] sm:$0xff]
    %45 = vst [vmem:[#allocation2 + $0x8] sm:$0xff] %v44
    %v46 = vld [vmem:[#allocation2] sm:$0xff]
    %v47 = vld [vmem:[#allocation2 + $0x8] sm:$0xff]
    %v48 = vpack.c.bf16 %v46, %v46
    %v49 = vpack.c.bf16 %v47, %v47
    %v50 = vld [vmem:[#allocation3] sm:$0xff]
    %v51 = vld [vmem:[#allocation3 + $0x8] sm:$0xff]
    %v52 = vld [vmem:[#allocation3 + $0x10] sm:$0xff]
    %v53 = vld [vmem:[#allocation3 + $0x18] sm:$0xff]
    %v54 = vld [vmem:[#allocation3 + $0x20] sm:$0xff]
    %v55 = vld [vmem:[#allocation3 + $0x28] sm:$0xff]
    %v56 = vld [vmem:[#allocation3 + $0x30] sm:$0xff]
    %v57 = vld [vmem:[#allocation3 + $0x38] sm:$0xff]
    %v58 = vld [vmem:[#allocation3 + $0x40] sm:$0xff]
    %v59 = vld [vmem:[#allocation3 + $0x48] sm:$0xff]
    %v60 = vld [vmem:[#allocation3 + $0x50] sm:$0xff]
    %v61 = vld [vmem:[#allocation3 + $0x58] sm:$0xff]
    %v62 = vld [vmem:[#allocation3 + $0x60] sm:$0xff]
    %v63 = vld [vmem:[#allocation3 + $0x68] sm:$0xff]
    %v64 = vld [vmem:[#allocation3 + $0x70] sm:$0xff]
    %v65 = vld [vmem:[#allocation3 + $0x78] sm:$0xff]
    %v66 = vld [vmem:[#allocation3 + $0x80] sm:$0xff]
    %v67 = vld [vmem:[#allocation3 + $0x88] sm:$0xff]
    %v68 = vld [vmem:[#allocation3 + $0x90] sm:$0xff]
    %v69 = vld [vmem:[#allocation3 + $0x98] sm:$0xff]
    %v70 = vld [vmem:[#allocation3 + $0xa0] sm:$0xff]
    %v71 = vld [vmem:[#allocation3 + $0xa8] sm:$0xff]
    %v72 = vld [vmem:[#allocation3 + $0xb0] sm:$0xff]
    %v73 = vld [vmem:[#allocation3 + $0xb8] sm:$0xff]
    %v74 = vld [vmem:[#allocation3 + $0xc0] sm:$0xff]
    %v75 = vld [vmem:[#allocation3 + $0xc8] sm:$0xff]
    %v76 = vld [vmem:[#allocation3 + $0xd0] sm:$0xff]
    %v77 = vld [vmem:[#allocation3 + $0xd8] sm:$0xff]
    %v78 = vld [vmem:[#allocation3 + $0xe0] sm:$0xff]
    %v79 = vld [vmem:[#allocation3 + $0xe8] sm:$0xff]
    %v80 = vld [vmem:[#allocation3 + $0xf0] sm:$0xff]
    %v81 = vld [vmem:[#allocation3 + $0xf8] sm:$0xff]
    %v82 = vld [vmem:[#allocation3 + $0x100] sm:$0xff]
    %v83 = vld [vmem:[#allocation3 + $0x108] sm:$0xff]
    %v84 = vld [vmem:[#allocation3 + $0x110] sm:$0xff]
    %v85 = vld [vmem:[#allocation3 + $0x118] sm:$0xff]
    %v86 = vld [vmem:[#allocation3 + $0x120] sm:$0xff]
    %v87 = vld [vmem:[#allocation3 + $0x128] sm:$0xff]
    %v88 = vld [vmem:[#allocation3 + $0x130] sm:$0xff]
    %v89 = vld [vmem:[#allocation3 + $0x138] sm:$0xff]
    %v90 = vld [vmem:[#allocation3 + $0x140] sm:$0xff]
    %v91 = vld [vmem:[#allocation3 + $0x148] sm:$0xff]
    %v92 = vld [vmem:[#allocation3 + $0x150] sm:$0xff]
    %v93 = vld [vmem:[#allocation3 + $0x158] sm:$0xff]
    %v94 = vld [vmem:[#allocation3 + $0x160] sm:$0xff]
    %v95 = vld [vmem:[#allocation3 + $0x168] sm:$0xff]
    %v96 = vld [vmem:[#allocation3 + $0x170] sm:$0xff]
    %v97 = vld [vmem:[#allocation3 + $0x178] sm:$0xff]
    %v98 = vld [vmem:[#allocation3 + $0x180] sm:$0xff]
    %v99 = vld [vmem:[#allocation3 + $0x188] sm:$0xff]
    %v100 = vld [vmem:[#allocation3 + $0x190] sm:$0xff]
    %v101 = vld [vmem:[#allocation3 + $0x198] sm:$0xff]
    %v102 = vld [vmem:[#allocation3 + $0x1a0] sm:$0xff]
    %v103 = vld [vmem:[#allocation3 + $0x1a8] sm:$0xff]
    %v104 = vld [vmem:[#allocation3 + $0x1b0] sm:$0xff]
    %v105 = vld [vmem:[#allocation3 + $0x1b8] sm:$0xff]
    %v106 = vld [vmem:[#allocation3 + $0x1c0] sm:$0xff]
    %v107 = vld [vmem:[#allocation3 + $0x1c8] sm:$0xff]
    %v108 = vld [vmem:[#allocation3 + $0x1d0] sm:$0xff]
    %v109 = vld [vmem:[#allocation3 + $0x1d8] sm:$0xff]
    %v110 = vld [vmem:[#allocation3 + $0x1e0] sm:$0xff]
    %v111 = vld [vmem:[#allocation3 + $0x1e8] sm:$0xff]
    %v112 = vld [vmem:[#allocation3 + $0x1f0] sm:$0xff]
    %v113 = vld [vmem:[#allocation3 + $0x1f8] sm:$0xff]
    %v114 = vld [vmem:[%s4] sm:$0xf]
    %v116 = vperm.slane %v114, 0
    %v117 = vperm.slane %v114, 1
    %v118 = vperm.slane %v114, 2
    %v119 = vperm.slane %v114, 3
    %v188 = vunpack.c.l.b16 %v50
    %v189 = vunpack.c.h.b16 %v50
    %v190 = vunpack.c.l.b16 %v51
    %v191 = vunpack.c.h.b16 %v51
    %v192 = vunpack.c.l.b16 %v52
    %v193 = vunpack.c.h.b16 %v52
    %v194 = vunpack.c.l.b16 %v53
    %v195 = vunpack.c.h.b16 %v53
    %v196 = vunpack.c.l.b16 %v54
    %v197 = vunpack.c.h.b16 %v54
    %v198 = vunpack.c.l.b16 %v55
    %v199 = vunpack.c.h.b16 %v55
    %v200 = vunpack.c.l.b16 %v56
    %v201 = vunpack.c.h.b16 %v56
    %v202 = vunpack.c.l.b16 %v57
    %v203 = vunpack.c.h.b16 %v57
    %v204 = vunpack.c.l.b16 %v58
    %v205 = vunpack.c.h.b16 %v58
    %v206 = vunpack.c.l.b16 %v59
    %v207 = vunpack.c.h.b16 %v59
    %v208 = vunpack.c.l.b16 %v60
    %v209 = vunpack.c.h.b16 %v60
    %v210 = vunpack.c.l.b16 %v61
    %v211 = vunpack.c.h.b16 %v61
    %v212 = vunpack.c.l.b16 %v62
    %v213 = vunpack.c.h.b16 %v62
    %v214 = vunpack.c.l.b16 %v63
    %v215 = vunpack.c.h.b16 %v63
    %v216 = vunpack.c.l.b16 %v64
    %v217 = vunpack.c.h.b16 %v64
    %v218 = vunpack.c.l.b16 %v65
    %v219 = vunpack.c.h.b16 %v65
    %v220 = vunpack.c.l.b16 %v66
    %v221 = vunpack.c.h.b16 %v66
    %v222 = vunpack.c.l.b16 %v67
    %v223 = vunpack.c.h.b16 %v67
    %v224 = vunpack.c.l.b16 %v68
    %v225 = vunpack.c.h.b16 %v68
    %v226 = vunpack.c.l.b16 %v69
    %v227 = vunpack.c.h.b16 %v69
    %v228 = vunpack.c.l.b16 %v70
    %v229 = vunpack.c.h.b16 %v70
    %v230 = vunpack.c.l.b16 %v71
    %v231 = vunpack.c.h.b16 %v71
    %v232 = vunpack.c.l.b16 %v72
    %v233 = vunpack.c.h.b16 %v72
    %v234 = vunpack.c.l.b16 %v73
    %v235 = vunpack.c.h.b16 %v73
    %v236 = vunpack.c.l.b16 %v74
    %v237 = vunpack.c.h.b16 %v74
    %v238 = vunpack.c.l.b16 %v75
    %v239 = vunpack.c.h.b16 %v75
    %v240 = vunpack.c.l.b16 %v76
    %v241 = vunpack.c.h.b16 %v76
    %v242 = vunpack.c.l.b16 %v77
    %v243 = vunpack.c.h.b16 %v77
    %v244 = vunpack.c.l.b16 %v78
    %v245 = vunpack.c.h.b16 %v78
    %v246 = vunpack.c.l.b16 %v79
    %v247 = vunpack.c.h.b16 %v79
    %v248 = vunpack.c.l.b16 %v80
    %v249 = vunpack.c.h.b16 %v80
    %v250 = vunpack.c.l.b16 %v81
    %v251 = vunpack.c.h.b16 %v81
    %v252 = vunpack.c.l.b16 %v82
    %v253 = vunpack.c.h.b16 %v82
    %v254 = vunpack.c.l.b16 %v83
    %v255 = vunpack.c.h.b16 %v83
    %v256 = vunpack.c.l.b16 %v84
    %v257 = vunpack.c.h.b16 %v84
    %v258 = vunpack.c.l.b16 %v85
    %v259 = vunpack.c.h.b16 %v85
    %v260 = vunpack.c.l.b16 %v86
    %v261 = vunpack.c.h.b16 %v86
    %v262 = vunpack.c.l.b16 %v87
    %v263 = vunpack.c.h.b16 %v87
    %v264 = vunpack.c.l.b16 %v88
    %v265 = vunpack.c.h.b16 %v88
    %v266 = vunpack.c.l.b16 %v89
    %v267 = vunpack.c.h.b16 %v89
    %v268 = vunpack.c.l.b16 %v90
    %v269 = vunpack.c.h.b16 %v90
    %v270 = vunpack.c.l.b16 %v91
    %v271 = vunpack.c.h.b16 %v91
    %v272 = vunpack.c.l.b16 %v92
    %v273 = vunpack.c.h.b16 %v92
    %v274 = vunpack.c.l.b16 %v93
    %v275 = vunpack.c.h.b16 %v93
    %v276 = vunpack.c.l.b16 %v94
    %v277 = vunpack.c.h.b16 %v94
    %v278 = vunpack.c.l.b16 %v95
    %v279 = vunpack.c.h.b16 %v95
    %v280 = vunpack.c.l.b16 %v96
    %v281 = vunpack.c.h.b16 %v96
    %v282 = vunpack.c.l.b16 %v97
    %v283 = vunpack.c.h.b16 %v97
    %v284 = vunpack.c.l.b16 %v98
    %v285 = vunpack.c.h.b16 %v98
    %v286 = vunpack.c.l.b16 %v99
    %v287 = vunpack.c.h.b16 %v99
    %v288 = vunpack.c.l.b16 %v100
    %v289 = vunpack.c.h.b16 %v100
    %v290 = vunpack.c.l.b16 %v101
    %v291 = vunpack.c.h.b16 %v101
    %v292 = vunpack.c.l.b16 %v102
    %v293 = vunpack.c.h.b16 %v102
    %v294 = vunpack.c.l.b16 %v103
    %v295 = vunpack.c.h.b16 %v103
    %v296 = vunpack.c.l.b16 %v104
    %v297 = vunpack.c.h.b16 %v104
    %v298 = vunpack.c.l.b16 %v105
    %v299 = vunpack.c.h.b16 %v105
    %v300 = vunpack.c.l.b16 %v106
    %v301 = vunpack.c.h.b16 %v106
    %v302 = vunpack.c.l.b16 %v107
    %v303 = vunpack.c.h.b16 %v107
    %v304 = vunpack.c.l.b16 %v108
    %v305 = vunpack.c.h.b16 %v108
    %v306 = vunpack.c.l.b16 %v109
    %v307 = vunpack.c.h.b16 %v109
    %v308 = vunpack.c.l.b16 %v110
    %v309 = vunpack.c.h.b16 %v110
    %v310 = vunpack.c.l.b16 %v111
    %v311 = vunpack.c.h.b16 %v111
    %v312 = vunpack.c.l.b16 %v112
    %v313 = vunpack.c.h.b16 %v112
    %v314 = vunpack.c.l.b16 %v113
    %v315 = vunpack.c.h.b16 %v113
    %v316 = vpack.c.b16 %v192, %v188
    %v317 = vpack.c.b16 %v193, %v189
    %v318 = vpack.c.b16 %v194, %v190
    %v319 = vpack.c.b16 %v195, %v191
    %v320 = vpack.c.b16 %v200, %v196
    %v321 = vpack.c.b16 %v201, %v197
    %v322 = vpack.c.b16 %v202, %v198
    %v323 = vpack.c.b16 %v203, %v199
    %v324 = vpack.c.b16 %v208, %v204
    %v325 = vpack.c.b16 %v209, %v205
    %v326 = vpack.c.b16 %v210, %v206
    %v327 = vpack.c.b16 %v211, %v207
    %v328 = vpack.c.b16 %v216, %v212
    %v329 = vpack.c.b16 %v217, %v213
    %v330 = vpack.c.b16 %v218, %v214
    %v331 = vpack.c.b16 %v219, %v215
    %v332 = vpack.c.b16 %v224, %v220
    %v333 = vpack.c.b16 %v225, %v221
    %v334 = vpack.c.b16 %v226, %v222
    %v335 = vpack.c.b16 %v227, %v223
    %v336 = vpack.c.b16 %v232, %v228
    %v337 = vpack.c.b16 %v233, %v229
    %v338 = vpack.c.b16 %v234, %v230
    %v339 = vpack.c.b16 %v235, %v231
    %v340 = vpack.c.b16 %v240, %v236
    %v341 = vpack.c.b16 %v241, %v237
    %v342 = vpack.c.b16 %v242, %v238
    %v343 = vpack.c.b16 %v243, %v239
    %v344 = vpack.c.b16 %v248, %v244
    %v345 = vpack.c.b16 %v249, %v245
    %v346 = vpack.c.b16 %v250, %v246
    %v347 = vpack.c.b16 %v251, %v247
    %v348 = vpack.c.b16 %v256, %v252
    %v349 = vpack.c.b16 %v257, %v253
    %v350 = vpack.c.b16 %v258, %v254
    %v351 = vpack.c.b16 %v259, %v255
    %v352 = vpack.c.b16 %v264, %v260
    %v353 = vpack.c.b16 %v265, %v261
    %v354 = vpack.c.b16 %v266, %v262
    %v355 = vpack.c.b16 %v267, %v263
    %v356 = vpack.c.b16 %v272, %v268
    %v357 = vpack.c.b16 %v273, %v269
    %v358 = vpack.c.b16 %v274, %v270
    %v359 = vpack.c.b16 %v275, %v271
    %v360 = vpack.c.b16 %v280, %v276
    %v361 = vpack.c.b16 %v281, %v277
    %v362 = vpack.c.b16 %v282, %v278
    %v363 = vpack.c.b16 %v283, %v279
    %v364 = vpack.c.b16 %v288, %v284
    %v365 = vpack.c.b16 %v289, %v285
    %v366 = vpack.c.b16 %v290, %v286
    %v367 = vpack.c.b16 %v291, %v287
    %v368 = vpack.c.b16 %v296, %v292
    %v369 = vpack.c.b16 %v297, %v293
    %v370 = vpack.c.b16 %v298, %v294
    %v371 = vpack.c.b16 %v299, %v295
    %v372 = vpack.c.b16 %v304, %v300
    %v373 = vpack.c.b16 %v305, %v301
    %v374 = vpack.c.b16 %v306, %v302
    %v375 = vpack.c.b16 %v307, %v303
    %v376 = vpack.c.b16 %v312, %v308
    %v377 = vpack.c.b16 %v313, %v309
    %v378 = vpack.c.b16 %v314, %v310
    %v379 = vpack.c.b16 %v315, %v311
    %444 = vmatpush.bf16.msra.mxu0 %v344
    %445 = vmatpush.bf16.msra.mxu0 %v340
    %446 = vmatpush.bf16.msra.mxu0 %v336
    %447 = vmatpush.bf16.msra.mxu0 %v332
    %448 = vmatpush.bf16.msra.mxu0 %v328
    %449 = vmatpush.bf16.msra.mxu0 %v324
    %450 = vmatpush.bf16.msra.mxu0 %v320
    %451 = vmatpush.bf16.msra.mxu0 %v316
    %452 = vmatmul.bf16.gmra.mxu0 %v48
    %v453 = vpop.f32.mrf.mxu0
    %v454 = vadd.f32 %v116, %v453
    %v455 = vpop.f32.mrf.mxu0
    %456 = vdwg.mxu0
    %457 = vmatpush.bf16.msra.mxu0 %v376
    %458 = vmatpush.bf16.msra.mxu0 %v372
    %459 = vmatpush.bf16.msra.mxu0 %v368
    %460 = vmatpush.bf16.msra.mxu0 %v364
    %461 = vmatpush.bf16.msra.mxu0 %v360
    %462 = vmatpush.bf16.msra.mxu0 %v356
    %463 = vmatpush.bf16.msra.mxu0 %v352
    %464 = vmatpush.bf16.msra.mxu0 %v348
    %465 = vmatmul.bf16.gmra.mxu0 %v49
    %v466 = vpop.f32.mrf.mxu0
    %v467 = vadd.f32 %v454, %v466
    %v468 = vpop.f32.mrf.mxu0
    %469 = vdwg.mxu0
    %470 = vmatpush.bf16.msra.mxu0 %v345
    %471 = vmatpush.bf16.msra.mxu0 %v341
    %472 = vmatpush.bf16.msra.mxu0 %v337
    %473 = vmatpush.bf16.msra.mxu0 %v333
    %474 = vmatpush.bf16.msra.mxu0 %v329
    %475 = vmatpush.bf16.msra.mxu0 %v325
    %476 = vmatpush.bf16.msra.mxu0 %v321
    %477 = vmatpush.bf16.msra.mxu0 %v317
    %478 = vmatmul.bf16.gmra.mxu0 %v48
    %v479 = vpop.f32.mrf.mxu0
    %v480 = vadd.f32 %v117, %v479
    %v481 = vpop.f32.mrf.mxu0
    %482 = vdwg.mxu0
    %483 = vmatpush.bf16.msra.mxu0 %v377
    %484 = vmatpush.bf16.msra.mxu0 %v373
    %485 = vmatpush.bf16.msra.mxu0 %v369
    %486 = vmatpush.bf16.msra.mxu0 %v365
    %487 = vmatpush.bf16.msra.mxu0 %v361
    %488 = vmatpush.bf16.msra.mxu0 %v357
    %489 = vmatpush.bf16.msra.mxu0 %v353
    %490 = vmatpush.bf16.msra.mxu0 %v349
    %491 = vmatmul.bf16.gmra.mxu0 %v49
    %v492 = vpop.f32.mrf.mxu0
    %v493 = vadd.f32 %v480, %v492
    %v494 = vpop.f32.mrf.mxu0
    %495 = vdwg.mxu0
    %496 = vmatpush.bf16.msra.mxu0 %v346
    %497 = vmatpush.bf16.msra.mxu0 %v342
    %498 = vmatpush.bf16.msra.mxu0 %v338
    %499 = vmatpush.bf16.msra.mxu0 %v334
    %500 = vmatpush.bf16.msra.mxu0 %v330
    %501 = vmatpush.bf16.msra.mxu0 %v326
    %502 = vmatpush.bf16.msra.mxu0 %v322
    %503 = vmatpush.bf16.msra.mxu0 %v318
    %504 = vmatmul.bf16.gmra.mxu0 %v48
    %v505 = vpop.f32.mrf.mxu0
    %v506 = vadd.f32 %v118, %v505
    %v507 = vpop.f32.mrf.mxu0
    %508 = vdwg.mxu0
    %509 = vmatpush.bf16.msra.mxu0 %v378
    %510 = vmatpush.bf16.msra.mxu0 %v374
    %511 = vmatpush.bf16.msra.mxu0 %v370
    %512 = vmatpush.bf16.msra.mxu0 %v366
    %513 = vmatpush.bf16.msra.mxu0 %v362
    %514 = vmatpush.bf16.msra.mxu0 %v358
    %515 = vmatpush.bf16.msra.mxu0 %v354
    %516 = vmatpush.bf16.msra.mxu0 %v350
    %517 = vmatmul.bf16.gmra.mxu0 %v49
    %v518 = vpop.f32.mrf.mxu0
    %v519 = vadd.f32 %v506, %v518
    %v520 = vpop.f32.mrf.mxu0
    %521 = vdwg.mxu0
    %522 = vmatpush.bf16.msra.mxu0 %v347
    %523 = vmatpush.bf16.msra.mxu0 %v343
    %524 = vmatpush.bf16.msra.mxu0 %v339
    %525 = vmatpush.bf16.msra.mxu0 %v335
    %526 = vmatpush.bf16.msra.mxu0 %v331
    %527 = vmatpush.bf16.msra.mxu0 %v327
    %528 = vmatpush.bf16.msra.mxu0 %v323
    %529 = vmatpush.bf16.msra.mxu0 %v319
    %530 = vmatmul.bf16.gmra.mxu0 %v48
    %v531 = vpop.f32.mrf.mxu0
    %v532 = vadd.f32 %v119, %v531
    %v533 = vpop.f32.mrf.mxu0
    %534 = vdwg.mxu0
    %535 = vmatpush.bf16.msra.mxu0 %v379
    %536 = vmatpush.bf16.msra.mxu0 %v375
    %537 = vmatpush.bf16.msra.mxu0 %v371
    %538 = vmatpush.bf16.msra.mxu0 %v367
    %539 = vmatpush.bf16.msra.mxu0 %v363
    %540 = vmatpush.bf16.msra.mxu0 %v359
    %541 = vmatpush.bf16.msra.mxu0 %v355
    %542 = vmatpush.bf16.msra.mxu0 %v351
    %543 = vmatmul.bf16.gmra.mxu0 %v49
    %v544 = vpop.f32.mrf.mxu0
    %v545 = vadd.f32 %v532, %v544
    %v546 = vpop.f32.mrf.mxu0
    %547 = vdwg.mxu0
    %v548 = vxor.u32 %v467, 2147483648
    %v549 = vxor.u32 %v493, 2147483648
    %v550 = vxor.u32 %v519, 2147483648
    %v551 = vmul.f32 %v548, 1.442695
    %v552 = vpow.pop %v551
    %v553 = vmul.f32 %v549, 1.442695
    %v554 = vpow.pop %v553
    %v555 = vmul.f32 %v550, 1.442695
    %v556 = vpow.pop %v555
    %v557 = vadd.f32 %v552, 1.0
    %v558 = vadd.f32 %v554, 1.0
    %v559 = vadd.f32 %v556, 1.0
    %v560 = vrcp.pop %v557
    %v561 = vmul.f32 %v557, %v560
    %v562 = vsub.f32 1.0, %v561
    %v563 = vmul.f32 %v560, %v562
    %v564 = vadd.f32 %v560, %v563
    %vm565 = vweird.f32 %v557
    %vm566 = vweird.f32 %v560
    %vm567 = vmor %vm565, %vm566
    %v568 = vsel %vm567, %v560, %v564
    %v569 = vand.u32 2147483647, %v557
    %vm570 = vcmp.eq.f32.partialorder %v569, 8.507059e+37
    %v571 = vand.u32 %v557, 2147483648
    %v572 = vor.u32 1.1754944e-38, %v571
    %v573 = vsel %vm570, %v572, %v568
    %v574 = vmul.f32 1.0, %v573
    %v575 = vrcp.pop %v558
    %v576 = vmul.f32 %v558, %v575
    %v577 = vsub.f32 1.0, %v576
    %v578 = vmul.f32 %v575, %v577
    %v579 = vadd.f32 %v575, %v578
    %vm580 = vweird.f32 %v558
    %vm581 = vweird.f32 %v575
    %vm582 = vmor %vm580, %vm581
    %v583 = vsel %vm582, %v575, %v579
    %v584 = vand.u32 2147483647, %v558
    %vm585 = vcmp.eq.f32.partialorder %v584, 8.507059e+37
    %v586 = vand.u32 %v558, 2147483648
    %v587 = vor.u32 1.1754944e-38, %v586
    %v588 = vsel %vm585, %v587, %v583
    %v589 = vmul.f32 1.0, %v588
    %v590 = vrcp.pop %v559
    %v591 = vmul.f32 %v559, %v590
    %v592 = vsub.f32 1.0, %v591
    %v593 = vmul.f32 %v590, %v592
    %v594 = vadd.f32 %v590, %v593
    %vm595 = vweird.f32 %v559
    %vm596 = vweird.f32 %v590
    %vm597 = vmor %vm595, %vm596
    %v598 = vsel %vm597, %v590, %v594
    %v599 = vand.u32 2147483647, %v559
    %vm600 = vcmp.eq.f32.partialorder %v599, 8.507059e+37
    %v601 = vand.u32 %v559, 2147483648
    %v602 = vor.u32 1.1754944e-38, %v601
    %v603 = vsel %vm600, %v602, %v598
    %v604 = vmul.f32 1.0, %v603
    %v605 = vtanh.pop %v545
    %v606 = vld [vmem:[%s2] sm:$0xff]
    %v607 = vmul.f32 %v589, %v606
    %v608 = vmul.f32 %v574, %v605
    %v609 = vadd.f32 %v607, %v608
    %v610 = vtanh.pop %v609
    %v611 = vmul.f32 %v604, %v610
    %612 = vst [vmem:[%s5] sm:$0xff] %v611
    %613 = vst [vmem:[%s6] sm:$0xff] %v609
    %614 = vst [vmem:[#allocation2] sm:$0xff] %v611
    %s615 = scalar_lea.vmem %s1, 8
    %v616 = vld [vmem:[%s615] sm:$0xff]
    %617 = vst [vmem:[#allocation2 + $0x8] sm:$0xff] %v616
    %v618 = vld [vmem:[#allocation2] sm:$0xff]
    %v619 = vld [vmem:[#allocation2 + $0x8] sm:$0xff]
    %v620 = vpack.c.bf16 %v618, %v618
    %v621 = vpack.c.bf16 %v619, %v619
    %s622 = scalar_lea.vmem [#allocation3], 512
    %v623 = vld [vmem:[%s622] sm:$0xff]
    %v624 = vld [vmem:[%s622 + $0x8] sm:$0xff]
    %v625 = vld [vmem:[%s622 + $0x10] sm:$0xff]
    %v626 = vld [vmem:[%s622 + $0x18] sm:$0xff]
    %v627 = vld [vmem:[%s622 + $0x20] sm:$0xff]
    %v628 = vld [vmem:[%s622 + $0x28] sm:$0xff]
    %v629 = vld [vmem:[%s622 + $0x30] sm:$0xff]
    %v630 = vld [vmem:[%s622 + $0x38] sm:$0xff]
    %v631 = vld [vmem:[%s622 + $0x40] sm:$0xff]
    %v632 = vld [vmem:[%s622 + $0x48] sm:$0xff]
    %v633 = vld [vmem:[%s622 + $0x50] sm:$0xff]
    %v634 = vld [vmem:[%s622 + $0x58] sm:$0xff]
    %v635 = vld [vmem:[%s622 + $0x60] sm:$0xff]
    %v636 = vld [vmem:[%s622 + $0x68] sm:$0xff]
    %v637 = vld [vmem:[%s622 + $0x70] sm:$0xff]
    %v638 = vld [vmem:[%s622 + $0x78] sm:$0xff]
    %v639 = vld [vmem:[%s622 + $0x80] sm:$0xff]
    %v640 = vld [vmem:[%s622 + $0x88] sm:$0xff]
    %v641 = vld [vmem:[%s622 + $0x90] sm:$0xff]
    %v642 = vld [vmem:[%s622 + $0x98] sm:$0xff]
    %v643 = vld [vmem:[%s622 + $0xa0] sm:$0xff]
    %v644 = vld [vmem:[%s622 + $0xa8] sm:$0xff]
    %v645 = vld [vmem:[%s622 + $0xb0] sm:$0xff]
    %v646 = vld [vmem:[%s622 + $0xb8] sm:$0xff]
    %v647 = vld [vmem:[%s622 + $0xc0] sm:$0xff]
    %v648 = vld [vmem:[%s622 + $0xc8] sm:$0xff]
    %v649 = vld [vmem:[%s622 + $0xd0] sm:$0xff]
    %v650 = vld [vmem:[%s622 + $0xd8] sm:$0xff]
    %v651 = vld [vmem:[%s622 + $0xe0] sm:$0xff]
    %v652 = vld [vmem:[%s622 + $0xe8] sm:$0xff]
    %v653 = vld [vmem:[%s622 + $0xf0] sm:$0xff]
    %v654 = vld [vmem:[%s622 + $0xf8] sm:$0xff]
    %v655 = vld [vmem:[%s622 + $0x100] sm:$0xff]
    %v656 = vld [vmem:[%s622 + $0x108] sm:$0xff]
    %v657 = vld [vmem:[%s622 + $0x110] sm:$0xff]
    %v658 = vld [vmem:[%s622 + $0x118] sm:$0xff]
    %v659 = vld [vmem:[%s622 + $0x120] sm:$0xff]
    %v660 = vld [vmem:[%s622 + $0x128] sm:$0xff]
    %v661 = vld [vmem:[%s622 + $0x130] sm:$0xff]
    %v662 = vld [vmem:[%s622 + $0x138] sm:$0xff]
    %v663 = vld [vmem:[%s622 + $0x140] sm:$0xff]
    %v664 = vld [vmem:[%s622 + $0x148] sm:$0xff]
    %v665 = vld [vmem:[%s622 + $0x150] sm:$0xff]
    %v666 = vld [vmem:[%s622 + $0x158] sm:$0xff]
    %v667 = vld [vmem:[%s622 + $0x160] sm:$0xff]
    %v668 = vld [vmem:[%s622 + $0x168] sm:$0xff]
    %v669 = vld [vmem:[%s622 + $0x170] sm:$0xff]
    %v670 = vld [vmem:[%s622 + $0x178] sm:$0xff]
    %v671 = vld [vmem:[%s622 + $0x180] sm:$0xff]
    %v672 = vld [vmem:[%s622 + $0x188] sm:$0xff]
    %v673 = vld [vmem:[%s622 + $0x190] sm:$0xff]
    %v674 = vld [vmem:[%s622 + $0x198] sm:$0xff]
    %v675 = vld [vmem:[%s622 + $0x1a0] sm:$0xff]
    %v676 = vld [vmem:[%s622 + $0x1a8] sm:$0xff]
    %v677 = vld [vmem:[%s622 + $0x1b0] sm:$0xff]
    %v678 = vld [vmem:[%s622 + $0x1b8] sm:$0xff]
    %v679 = vld [vmem:[%s622 + $0x1c0] sm:$0xff]
    %v680 = vld [vmem:[%s622 + $0x1c8] sm:$0xff]
    %v681 = vld [vmem:[%s622 + $0x1d0] sm:$0xff]
    %v682 = vld [vmem:[%s622 + $0x1d8] sm:$0xff]
    %v683 = vld [vmem:[%s622 + $0x1e0] sm:$0xff]
    %v684 = vld [vmem:[%s622 + $0x1e8] sm:$0xff]
    %v685 = vld [vmem:[%s622 + $0x1f0] sm:$0xff]
    %v686 = vld [vmem:[%s622 + $0x1f8] sm:$0xff]
    %s687 = scalar_lea.vmem %s4, 4
    %v688 = vld [vmem:[%s687] sm:$0xf]
    %v690 = vperm.slane %v688, 0
    %v691 = vperm.slane %v688, 1
    %v692 = vperm.slane %v688, 2
    %v693 = vperm.slane %v688, 3
    %v762 = vunpack.c.l.b16 %v623
    %v763 = vunpack.c.h.b16 %v623
    %v764 = vunpack.c.l.b16 %v624
    %v765 = vunpack.c.h.b16 %v624
    %v766 = vunpack.c.l.b16 %v625
    %v767 = vunpack.c.h.b16 %v625
    %v768 = vunpack.c.l.b16 %v626
    %v769 = vunpack.c.h.b16 %v626
    %v770 = vunpack.c.l.b16 %v627
    %v771 = vunpack.c.h.b16 %v627
    %v772 = vunpack.c.l.b16 %v628
    %v773 = vunpack.c.h.b16 %v628
    %v774 = vunpack.c.l.b16 %v629
    %v775 = vunpack.c.h.b16 %v629
    %v776 = vunpack.c.l.b16 %v630
    %v777 = vunpack.c.h.b16 %v630
    %v778 = vunpack.c.l.b16 %v631
    %v779 = vunpack.c.h.b16 %v631
    %v780 = vunpack.c.l.b16 %v632
    %v781 = vunpack.c.h.b16 %v632
    %v782 = vunpack.c.l.b16 %v633
    %v783 = vunpack.c.h.b16 %v633
    %v784 = vunpack.c.l.b16 %v634
    %v785 = vunpack.c.h.b16 %v634
    %v786 = vunpack.c.l.b16 %v635
    %v787 = vunpack.c.h.b16 %v635
    %v788 = vunpack.c.l.b16 %v636
    %v789 = vunpack.c.h.b16 %v636
    %v790 = vunpack.c.l.b16 %v637
    %v791 = vunpack.c.h.b16 %v637
    %v792 = vunpack.c.l.b16 %v638
    %v793 = vunpack.c.h.b16 %v638
    %v794 = vunpack.c.l.b16 %v639
    %v795 = vunpack.c.h.b16 %v639
    %v796 = vunpack.c.l.b16 %v640
    %v797 = vunpack.c.h.b16 %v640
    %v798 = vunpack.c.l.b16 %v641
    %v799 = vunpack.c.h.b16 %v641
    %v800 = vunpack.c.l.b16 %v642
    %v801 = vunpack.c.h.b16 %v642
    %v802 = vunpack.c.l.b16 %v643
    %v803 = vunpack.c.h.b16 %v643
    %v804 = vunpack.c.l.b16 %v644
    %v805 = vunpack.c.h.b16 %v644
    %v806 = vunpack.c.l.b16 %v645
    %v807 = vunpack.c.h.b16 %v645
    %v808 = vunpack.c.l.b16 %v646
    %v809 = vunpack.c.h.b16 %v646
    %v810 = vunpack.c.l.b16 %v647
    %v811 = vunpack.c.h.b16 %v647
    %v812 = vunpack.c.l.b16 %v648
    %v813 = vunpack.c.h.b16 %v648
    %v814 = vunpack.c.l.b16 %v649
    %v815 = vunpack.c.h.b16 %v649
    %v816 = vunpack.c.l.b16 %v650
    %v817 = vunpack.c.h.b16 %v650
    %v818 = vunpack.c.l.b16 %v651
    %v819 = vunpack.c.h.b16 %v651
    %v820 = vunpack.c.l.b16 %v652
    %v821 = vunpack.c.h.b16 %v652
    %v822 = vunpack.c.l.b16 %v653
    %v823 = vunpack.c.h.b16 %v653
    %v824 = vunpack.c.l.b16 %v654
    %v825 = vunpack.c.h.b16 %v654
    %v826 = vunpack.c.l.b16 %v655
    %v827 = vunpack.c.h.b16 %v655
    %v828 = vunpack.c.l.b16 %v656
    %v829 = vunpack.c.h.b16 %v656
    %v830 = vunpack.c.l.b16 %v657
    %v831 = vunpack.c.h.b16 %v657
    %v832 = vunpack.c.l.b16 %v658
    %v833 = vunpack.c.h.b16 %v658
    %v834 = vunpack.c.l.b16 %v659
    %v835 = vunpack.c.h.b16 %v659
    %v836 = vunpack.c.l.b16 %v660
    %v837 = vunpack.c.h.b16 %v660
    %v838 = vunpack.c.l.b16 %v661
    %v839 = vunpack.c.h.b16 %v661
    %v840 = vunpack.c.l.b16 %v662
    %v841 = vunpack.c.h.b16 %v662
    %v842 = vunpack.c.l.b16 %v663
    %v843 = vunpack.c.h.b16 %v663
    %v844 = vunpack.c.l.b16 %v664
    %v845 = vunpack.c.h.b16 %v664
    %v846 = vunpack.c.l.b16 %v665
    %v847 = vunpack.c.h.b16 %v665
    %v848 = vunpack.c.l.b16 %v666
    %v849 = vunpack.c.h.b16 %v666
    %v850 = vunpack.c.l.b16 %v667
    %v851 = vunpack.c.h.b16 %v667
    %v852 = vunpack.c.l.b16 %v668
    %v853 = vunpack.c.h.b16 %v668
    %v854 = vunpack.c.l.b16 %v669
    %v855 = vunpack.c.h.b16 %v669
    %v856 = vunpack.c.l.b16 %v670
    %v857 = vunpack.c.h.b16 %v670
    %v858 = vunpack.c.l.b16 %v671
    %v859 = vunpack.c.h.b16 %v671
    %v860 = vunpack.c.l.b16 %v672
    %v861 = vunpack.c.h.b16 %v672
    %v862 = vunpack.c.l.b16 %v673
    %v863 = vunpack.c.h.b16 %v673
    %v864 = vunpack.c.l.b16 %v674
    %v865 = vunpack.c.h.b16 %v674
    %v866 = vunpack.c.l.b16 %v675
    %v867 = vunpack.c.h.b16 %v675
    %v868 = vunpack.c.l.b16 %v676
    %v869 = vunpack.c.h.b16 %v676
    %v870 = vunpack.c.l.b16 %v677
    %v871 = vunpack.c.h.b16 %v677
    %v872 = vunpack.c.l.b16 %v678
    %v873 = vunpack.c.h.b16 %v678
    %v874 = vunpack.c.l.b16 %v679
    %v875 = vunpack.c.h.b16 %v679
    %v876 = vunpack.c.l.b16 %v680
    %v877 = vunpack.c.h.b16 %v680
    %v878 = vunpack.c.l.b16 %v681
    %v879 = vunpack.c.h.b16 %v681
    %v880 = vunpack.c.l.b16 %v682
    %v881 = vunpack.c.h.b16 %v682
    %v882 = vunpack.c.l.b16 %v683
    %v883 = vunpack.c.h.b16 %v683
    %v884 = vunpack.c.l.b16 %v684
    %v885 = vunpack.c.h.b16 %v684
    %v886 = vunpack.c.l.b16 %v685
    %v887 = vunpack.c.h.b16 %v685
    %v888 = vunpack.c.l.b16 %v686
    %v889 = vunpack.c.h.b16 %v686
    %v890 = vpack.c.b16 %v766, %v762
    %v891 = vpack.c.b16 %v767, %v763
    %v892 = vpack.c.b16 %v768, %v764
    %v893 = vpack.c.b16 %v769, %v765
    %v894 = vpack.c.b16 %v774, %v770
    %v895 = vpack.c.b16 %v775, %v771
    %v896 = vpack.c.b16 %v776, %v772
    %v897 = vpack.c.b16 %v777, %v773
    %v898 = vpack.c.b16 %v782, %v778
    %v899 = vpack.c.b16 %v783, %v779
    %v900 = vpack.c.b16 %v784, %v780
    %v901 = vpack.c.b16 %v785, %v781
    %v902 = vpack.c.b16 %v790, %v786
    %v903 = vpack.c.b16 %v791, %v787
    %v904 = vpack.c.b16 %v792, %v788
    %v905 = vpack.c.b16 %v793, %v789
    %v906 = vpack.c.b16 %v798, %v794
    %v907 = vpack.c.b16 %v799, %v795
    %v908 = vpack.c.b16 %v800, %v796
    %v909 = vpack.c.b16 %v801, %v797
    %v910 = vpack.c.b16 %v806, %v802
    %v911 = vpack.c.b16 %v807, %v803
    %v912 = vpack.c.b16 %v808, %v804
    %v913 = vpack.c.b16 %v809, %v805
    %v914 = vpack.c.b16 %v814, %v810
    %v915 = vpack.c.b16 %v815, %v811
    %v916 = vpack.c.b16 %v816, %v812
    %v917 = vpack.c.b16 %v817, %v813
    %v918 = vpack.c.b16 %v822, %v818
    %v919 = vpack.c.b16 %v823, %v819
    %v920 = vpack.c.b16 %v824, %v820
    %v921 = vpack.c.b16 %v825, %v821
    %v922 = vpack.c.b16 %v830, %v826
    %v923 = vpack.c.b16 %v831, %v827
    %v924 = vpack.c.b16 %v832, %v828
    %v925 = vpack.c.b16 %v833, %v829
    %v926 = vpack.c.b16 %v838, %v834
    %v927 = vpack.c.b16 %v839, %v835
    %v928 = vpack.c.b16 %v840, %v836
    %v929 = vpack.c.b16 %v841, %v837
    %v930 = vpack.c.b16 %v846, %v842
    %v931 = vpack.c.b16 %v847, %v843
    %v932 = vpack.c.b16 %v848, %v844
    %v933 = vpack.c.b16 %v849, %v845
    %v934 = vpack.c.b16 %v854, %v850
    %v935 = vpack.c.b16 %v855, %v851
    %v936 = vpack.c.b16 %v856, %v852
    %v937 = vpack.c.b16 %v857, %v853
    %v938 = vpack.c.b16 %v862, %v858
    %v939 = vpack.c.b16 %v863, %v859
    %v940 = vpack.c.b16 %v864, %v860
    %v941 = vpack.c.b16 %v865, %v861
    %v942 = vpack.c.b16 %v870, %v866
    %v943 = vpack.c.b16 %v871, %v867
    %v944 = vpack.c.b16 %v872, %v868
    %v945 = vpack.c.b16 %v873, %v869
    %v946 = vpack.c.b16 %v878, %v874
    %v947 = vpack.c.b16 %v879, %v875
    %v948 = vpack.c.b16 %v880, %v876
    %v949 = vpack.c.b16 %v881, %v877
    %v950 = vpack.c.b16 %v886, %v882
    %v951 = vpack.c.b16 %v887, %v883
    %v952 = vpack.c.b16 %v888, %v884
    %v953 = vpack.c.b16 %v889, %v885
    %1018 = vmatpush.bf16.msra.mxu0 %v918
    %1019 = vmatpush.bf16.msra.mxu0 %v914
    %1020 = vmatpush.bf16.msra.mxu0 %v910
    %1021 = vmatpush.bf16.msra.mxu0 %v906
    %1022 = vmatpush.bf16.msra.mxu0 %v902
    %1023 = vmatpush.bf16.msra.mxu0 %v898
    %1024 = vmatpush.bf16.msra.mxu0 %v894
    %1025 = vmatpush.bf16.msra.mxu0 %v890
    %1026 = vmatmul.bf16.gmra.mxu0 %v620
    %v1027 = vpop.f32.mrf.mxu0
    %v1028 = vadd.f32 %v690, %v1027
    %v1029 = vpop.f32.mrf.mxu0
    %1030 = vdwg.mxu0
    %1031 = vmatpush.bf16.msra.mxu0 %v950
    %1032 = vmatpush.bf16.msra.mxu0 %v946
    %1033 = vmatpush.bf16.msra.mxu0 %v942
    %1034 = vmatpush.bf16.msra.mxu0 %v938
    %1035 = vmatpush.bf16.msra.mxu0 %v934
    %1036 = vmatpush.bf16.msra.mxu0 %v930
    %1037 = vmatpush.bf16.msra.mxu0 %v926
    %1038 = vmatpush.bf16.msra.mxu0 %v922
    %1039 = vmatmul.bf16.gmra.mxu0 %v621
    %v1040 = vpop.f32.mrf.mxu0
    %v1041 = vadd.f32 %v1028, %v1040
    %v1042 = vpop.f32.mrf.mxu0
    %1043 = vdwg.mxu0
    %1044 = vmatpush.bf16.msra.mxu0 %v919
    %1045 = vmatpush.bf16.msra.mxu0 %v915
    %1046 = vmatpush.bf16.msra.mxu0 %v911
    %1047 = vmatpush.bf16.msra.mxu0 %v907
    %1048 = vmatpush.bf16.msra.mxu0 %v903
    %1049 = vmatpush.bf16.msra.mxu0 %v899
    %1050 = vmatpush.bf16.msra.mxu0 %v895
    %1051 = vmatpush.bf16.msra.mxu0 %v891
    %1052 = vmatmul.bf16.gmra.mxu0 %v620
    %v1053 = vpop.f32.mrf.mxu0
    %v1054 = vadd.f32 %v691, %v1053
    %v1055 = vpop.f32.mrf.mxu0
    %1056 = vdwg.mxu0
    %1057 = vmatpush.bf16.msra.mxu0 %v951
    %1058 = vmatpush.bf16.msra.mxu0 %v947
    %1059 = vmatpush.bf16.msra.mxu0 %v943
    %1060 = vmatpush.bf16.msra.mxu0 %v939
    %1061 = vmatpush.bf16.msra.mxu0 %v935
    %1062 = vmatpush.bf16.msra.mxu0 %v931
    %1063 = vmatpush.bf16.msra.mxu0 %v927
    %1064 = vmatpush.bf16.msra.mxu0 %v923
    %1065 = vmatmul.bf16.gmra.mxu0 %v621
    %v1066 = vpop.f32.mrf.mxu0
    %v1067 = vadd.f32 %v1054, %v1066
    %v1068 = vpop.f32.mrf.mxu0
    %1069 = vdwg.mxu0
    %1070 = vmatpush.bf16.msra.mxu0 %v920
    %1071 = vmatpush.bf16.msra.mxu0 %v916
    %1072 = vmatpush.bf16.msra.mxu0 %v912
    %1073 = vmatpush.bf16.msra.mxu0 %v908
    %1074 = vmatpush.bf16.msra.mxu0 %v904
    %1075 = vmatpush.bf16.msra.mxu0 %v900
    %1076 = vmatpush.bf16.msra.mxu0 %v896
    %1077 = vmatpush.bf16.msra.mxu0 %v892
    %1078 = vmatmul.bf16.gmra.mxu0 %v620
    %v1079 = vpop.f32.mrf.mxu0
    %v1080 = vadd.f32 %v692, %v1079
    %v1081 = vpop.f32.mrf.mxu0
    %1082 = vdwg.mxu0
    %1083 = vmatpush.bf16.msra.mxu0 %v952
    %1084 = vmatpush.bf16.msra.mxu0 %v948
    %1085 = vmatpush.bf16.msra.mxu0 %v944
    %1086 = vmatpush.bf16.msra.mxu0 %v940
    %1087 = vmatpush.bf16.msra.mxu0 %v936
    %1088 = vmatpush.bf16.msra.mxu0 %v932
    %1089 = vmatpush.bf16.msra.mxu0 %v928
    %1090 = vmatpush.bf16.msra.mxu0 %v924
    %1091 = vmatmul.bf16.gmra.mxu0 %v621
    %v1092 = vpop.f32.mrf.mxu0
    %v1093 = vadd.f32 %v1080, %v1092
    %v1094 = vpop.f32.mrf.mxu0
    %1095 = vdwg.mxu0
    %1096 = vmatpush.bf16.msra.mxu0 %v921
    %1097 = vmatpush.bf16.msra.mxu0 %v917
    %1098 = vmatpush.bf16.msra.mxu0 %v913
    %1099 = vmatpush.bf16.msra.mxu0 %v909
    %1100 = vmatpush.bf16.msra.mxu0 %v905
    %1101 = vmatpush.bf16.msra.mxu0 %v901
    %1102 = vmatpush.bf16.msra.mxu0 %v897
    %1103 = vmatpush.bf16.msra.mxu0 %v893
    %1104 = vmatmul.bf16.gmra.mxu0 %v620
    %v1105 = vpop.f32.mrf.mxu0
    %v1106 = vadd.f32 %v693, %v1105
    %v1107 = vpop.f32.mrf.mxu0
    %1108 = vdwg.mxu0
    %1109 = vmatpush.bf16.msra.mxu0 %v953
    %1110 = vmatpush.bf16.msra.mxu0 %v949
    %1111 = vmatpush.bf16.msra.mxu0 %v945
    %1112 = vmatpush.bf16.msra.mxu0 %v941
    %1113 = vmatpush.bf16.msra.mxu0 %v937
    %1114 = vmatpush.bf16.msra.mxu0 %v933
    %1115 = vmatpush.bf16.msra.mxu0 %v929
    %1116 = vmatpush.bf16.msra.mxu0 %v925
    %1117 = vmatmul.bf16.gmra.mxu0 %v621
    %v1118 = vpop.f32.mrf.mxu0
    %v1119 = vadd.f32 %v1106, %v1118
    %v1120 = vpop.f32.mrf.mxu0
    %1121 = vdwg.mxu0
    %v1122 = vxor.u32 %v1041, 2147483648
    %v1123 = vxor.u32 %v1067, 2147483648
    %v1124 = vxor.u32 %v1093, 2147483648
    %v1125 = vmul.f32 %v1122, 1.442695
    %v1126 = vpow.pop %v1125
    %v1127 = vmul.f32 %v1123, 1.442695
    %v1128 = vpow.pop %v1127
    %v1129 = vmul.f32 %v1124, 1.442695
    %v1130 = vpow.pop %v1129
    %v1131 = vadd.f32 %v1126, 1.0
    %v1132 = vadd.f32 %v1128, 1.0
    %v1133 = vadd.f32 %v1130, 1.0
    %v1134 = vrcp.pop %v1131
    %v1135 = vmul.f32 %v1131, %v1134
    %v1136 = vsub.f32 1.0, %v1135
    %v1137 = vmul.f32 %v1134, %v1136
    %v1138 = vadd.f32 %v1134, %v1137
    %vm1139 = vweird.f32 %v1131
    %vm1140 = vweird.f32 %v1134
    %vm1141 = vmor %vm1139, %vm1140
    %v1142 = vsel %vm1141, %v1134, %v1138
    %v1143 = vand.u32 2147483647, %v1131
    %vm1144 = vcmp.eq.f32.partialorder %v1143, 8.507059e+37
    %v1145 = vand.u32 %v1131, 2147483648
    %v1146 = vor.u32 1.1754944e-38, %v1145
    %v1147 = vsel %vm1144, %v1146, %v1142
    %v1148 = vmul.f32 1.0, %v1147
    %v1149 = vrcp.pop %v1132
    %v1150 = vmul.f32 %v1132, %v1149
    %v1151 = vsub.f32 1.0, %v1150
    %v1152 = vmul.f32 %v1149, %v1151
    %v1153 = vadd.f32 %v1149, %v1152
    %vm1154 = vweird.f32 %v1132
    %vm1155 = vweird.f32 %v1149
    %vm1156 = vmor %vm1154, %vm1155
    %v1157 = vsel %vm1156, %v1149, %v1153
    %v1158 = vand.u32 2147483647, %v1132
    %vm1159 = vcmp.eq.f32.partialorder %v1158, 8.507059e+37
    %v1160 = vand.u32 %v1132, 2147483648
    %v1161 = vor.u32 1.1754944e-38, %v1160
    %v1162 = vsel %vm1159, %v1161, %v1157
    %v1163 = vmul.f32 1.0, %v1162
    %v1164 = vrcp.pop %v1133
    %v1165 = vmul.f32 %v1133, %v1164
    %v1166 = vsub.f32 1.0, %v1165
    %v1167 = vmul.f32 %v1164, %v1166
    %v1168 = vadd.f32 %v1164, %v1167
    %vm1169 = vweird.f32 %v1133
    %vm1170 = vweird.f32 %v1164
    %vm1171 = vmor %vm1169, %vm1170
    %v1172 = vsel %vm1171, %v1164, %v1168
    %v1173 = vand.u32 2147483647, %v1133
    %vm1174 = vcmp.eq.f32.partialorder %v1173, 8.507059e+37
    %v1175 = vand.u32 %v1133, 2147483648
    %v1176 = vor.u32 1.1754944e-38, %v1175
    %v1177 = vsel %vm1174, %v1176, %v1172
    %v1178 = vmul.f32 1.0, %v1177
    %v1179 = vtanh.pop %v1119
    %s1180 = scalar_lea.vmem %s2, 8
    %v1181 = vld [vmem:[%s1180] sm:$0xff]
    %v1182 = vmul.f32 %v1163, %v1181
    %v1183 = vmul.f32 %v1148, %v1179
    %v1184 = vadd.f32 %v1182, %v1183
    %v1185 = vtanh.pop %v1184
    %v1186 = vmul.f32 %v1178, %v1185
    %s1187 = scalar_lea.vmem %s5, 8
    %1188 = vst [vmem:[%s1187] sm:$0xff] %v1186
    %s1189 = scalar_lea.vmem %s6, 8
    %1190 = vst [vmem:[%s1189] sm:$0xff] %v1184
    %1191 = vst [vmem:[#allocation2] sm:$0xff] %v1186
    // Predicated region
    $region30: #{multi_layer_lstm_cells.1} parent=1 // pred_check
      _
    $region31: #{multi_layer_lstm_cells.1} parent=1 // pred_check_branch
      %1193 = sbr.rel (0) target = $region33
    $region32: #{multi_layer_lstm_cells.1} parent=1 // pred_region
      _
    $region33: #{multi_layer_lstm_cells.1} parent=1 // pred_fallthru
      _
    // Predicated region
    $region34: #{multi_layer_lstm_cells.1} parent=1 // pred_check
      _
    $region35: #{multi_layer_lstm_cells.1} parent=1 // pred_check_branch
      %1195 = sbr.rel (0) target = $region37
    $region36: #{multi_layer_lstm_cells.1} parent=1 // pred_region
      _
    $region37: #{multi_layer_lstm_cells.1} parent=1 // pred_fallthru
      _
    // Predicated region
    $region38: #{multi_layer_lstm_cells.1} parent=1 // pred_check
      _
    $region39: #{multi_layer_lstm_cells.1} parent=1 // pred_check_branch
      %1197 = sbr.rel (0) target = $region41
    $region40: #{multi_layer_lstm_cells.1} parent=1 // pred_region
      _
    $region41: #{multi_layer_lstm_cells.1} parent=1 // pred_fallthru
      _
    // Predicated region
    $region42: #{multi_layer_lstm_cells.1} parent=1 // pred_check
      _
    $region43: #{multi_layer_lstm_cells.1} parent=1 // pred_check_branch
      %1199 = sbr.rel (0) target = $region45
    $region44: #{multi_layer_lstm_cells.1} parent=1 // pred_region
      _
    $region45: #{multi_layer_lstm_cells.1} parent=1 // pred_fallthru
      _
    %1200 = vsyncpa [#allocation4], 1

</llo_original>
